<compile_context>
chip_gen: v7x
topology: tpu7x:2x2x1
jax: 0.10.0
libtpu: 0.0.40
codegen_flags: <defaults>
</compile_context>

<pallas_src>
import jax
import jax.numpy as jnp
from jax.experimental import pallas as pl
from jax.experimental.pallas import tpu as pltpu


# 64K lanes/step: x tile (4->8, tb) + y tile (2->8, tb) f32, double-buffered
# => ~128 * tb bytes = 8 MiB, safely under v5e's 16 MiB scoped-VMEM default
# (v6e/v7x default to 32 MiB).
_MAX_TB = 64 * 1024


def _linear_t_kernel(wt_ref, b_ref, xt_ref, ot_ref):
    # wt_ref: (4, 2)  f32 in VMEM -- weight.T, resident across grid steps
    # b_ref : (2,)    f32 in SMEM -- bias scalars
    # xt_ref: (4, TB) f32 in VMEM -- features on sublanes, batch on lanes
    # ot_ref: (2, TB) f32 in VMEM -- lane-dense output tile
    x = xt_ref[...]                      # (4, TB)
    w = wt_ref[...]                      # (4, 2)
    # One full-tile multiply + sublane (axis-0) reduce per output row
    # (VPU mul + XLU reduce); bias folded in as a scalar-broadcast add.
    # Direct sublane stores -- no concatenate temporary.
    ot_ref[0:1, :] = jnp.sum(x * w[:, 0:1], axis=0, keepdims=True) + b_ref[0]
    ot_ref[1:2, :] = jnp.sum(x * w[:, 1:2], axis=0, keepdims=True) + b_ref[1]


def simple_model_forward(x, weight, bias):
    """Forward of SimpleModel: y = x @ weight.T + bias.

    x: (B, 4) f32; weight: (2, 4) f32 (torch layout); bias: (2,) f32.
    Returns (B, 2) f32.
    """
    B, K = x.shape
    N = weight.shape[0]

    # 128-aligned batch tile.  Prefer >= 2 grid steps when B allows (so v7x's
    # second TensorCore gets work via the "parallel" axis), cap at _MAX_TB so
    # the double-buffered VMEM footprint stays ~8 MiB on every generation.
    tb = max(128, min(_MAX_TB, pl.cdiv(B, 2 * 128) * 128))
    num_tiles = pl.cdiv(B, tb)

    x_t = x.T          # (4, B); no padding -- the grid handles the partial block
    w_t = weight.T     # (4, 2), tiny

    y_t = pl.pallas_call(
        _linear_t_kernel,
        out_shape=jax.ShapeDtypeStruct((N, B), jnp.float32),
        grid=(num_tiles,),
        in_specs=[
            pl.BlockSpec((K, N), lambda i: (0, 0)),               # weight.T (resident)
            pl.BlockSpec(memory_space=pltpu.MemorySpace.SMEM),    # bias (2,)
            pl.BlockSpec((K, tb), lambda i: (0, i)),              # x_T tile
        ],
        out_specs=pl.BlockSpec((N, tb), lambda i: (0, i)),
        compiler_params=pltpu.CompilerParams(
            dimension_semantics=("parallel",),   # megacore split on v7x
        ),
    )(w_t, bias, x_t)

    return y_t.T       # (B, 2)


if __name__ == "__main__":
    key = jax.random.PRNGKey(0)
    kx, kw, kb = jax.random.split(key, 3)

    # nn.Linear(4, 2) default init: U(-1/sqrt(fan_in), 1/sqrt(fan_in)), fan_in=4.
    bound = 1.0 / jnp.sqrt(4.0)
    weight = jax.random.uniform(kw, (2, 4), jnp.float32, -bound, bound)  # (out, in)
    bias = jax.random.uniform(kb, (2,), jnp.float32, -bound, bound)

    # Small shape consistent with the module: batch=2, in_features=4.
    x = jax.random.normal(kx, (2, 4), jnp.float32)
    y = simple_model_forward(x, weight, bias)
    jax.block_until_ready(y)

    y_ref = x @ weight.T + bias
    assert y.shape == (2, 2) and y.dtype == jnp.float32
    assert jnp.allclose(y, y_ref, atol=1e-5, rtol=1e-5), "mismatch vs reference"

    # Exercise the multi-tile / partial-block path (2 grid steps, B % 128 != 0).
    x_big = jax.random.normal(kx, (2500, 4), jnp.float32)
    y_big = simple_model_forward(x_big, weight, bias)
    jax.block_until_ready(y_big)
    assert jnp.allclose(y_big, x_big @ weight.T + bias, atol=1e-5, rtol=1e-5), \
        "mismatch vs reference (large batch)"

    print("KERNEL_OK")
</pallas_src>

<mosaic_0001>
module attributes {stable_mosaic.version = 11 : i64} {
  func.func @_linear_t_kernel(%arg0: i32, %arg1: memref<4x2xf32, #tpu.memory_space<vmem>>, %arg2: memref<2xf32, #tpu.memory_space<smem>>, %arg3: memref<4x128xf32, #tpu.memory_space<vmem>>, %arg4: memref<2x128xf32, #tpu.memory_space<vmem>>) attributes {dimension_semantics = [#tpu.dimension_semantics<parallel>], iteration_bounds = array<i64: 1>, scalar_prefetch = 0 : i64, scratch_operands = 0 : i64, tpu.core_type = #tpu.core_type<tc>, window_params = [{pipeline_mode = #tpu.pipeline_mode<synchronous>, transform_indices = @transform_0, window_bounds = array<i64: 4, 2>}, {transform_indices = @transform_1, window_bounds = array<i64: 2>}, {transform_indices = @transform_2, window_bounds = array<i64: 4, 128>}, {transform_indices = @transform_3, window_bounds = array<i64: 2, 128>}]} {
    %c0 = arith.constant 0 : index
    %c0_0 = arith.constant 0 : index
    %0 = vector.load %arg3[%c0, %c0_0] : memref<4x128xf32, #tpu.memory_space<vmem>>, vector<4x128xf32>
    %c0_1 = arith.constant 0 : index
    %c0_2 = arith.constant 0 : index
    %1 = vector.load %arg1[%c0_1, %c0_2] : memref<4x2xf32, #tpu.memory_space<vmem>>, vector<4x2xf32>
    %2 = vector.extract_strided_slice %1 {offsets = [0, 0], sizes = [4, 1], strides = [1, 1]} : vector<4x2xf32> to vector<4x1xf32>
    %3 = vector.broadcast %2 : vector<4x1xf32> to vector<4x128xf32>
    %4 = arith.mulf %0, %3 : vector<4x128xf32>
    %cst = arith.constant dense<0.000000e+00> : vector<128xf32>
    %5 = vector.multi_reduction <add>, %4, %cst [0] : vector<4x128xf32> to vector<128xf32>
    %6 = vector.shape_cast %5 : vector<128xf32> to vector<1x128xf32>
    %c0_3 = arith.constant 0 : index
    %7 = memref.load %arg2[%c0_3] : memref<2xf32, #tpu.memory_space<smem>>
    %8 = vector.broadcast %7 : f32 to vector<1x128xf32>
    %9 = arith.addf %6, %8 : vector<1x128xf32>
    %c0_4 = arith.constant 0 : index
    %c0_5 = arith.constant 0 : index
    %10 = vector.load %arg4[%c0_4, %c0_5] : memref<2x128xf32, #tpu.memory_space<vmem>>, vector<1x128xf32>
    tpu.vector_store %arg4[%c0_4, %c0_5], %9 {strides = array<i32>} : memref<2x128xf32, #tpu.memory_space<vmem>>, vector<1x128xf32>,
    %11 = vector.extract_strided_slice %1 {offsets = [0, 1], sizes = [4, 1], strides = [1, 1]} : vector<4x2xf32> to vector<4x1xf32>
    %12 = vector.broadcast %11 : vector<4x1xf32> to vector<4x128xf32>
    %13 = arith.mulf %0, %12 : vector<4x128xf32>
    %cst_6 = arith.constant dense<0.000000e+00> : vector<128xf32>
    %14 = vector.multi_reduction <add>, %13, %cst_6 [0] : vector<4x128xf32> to vector<128xf32>
    %15 = vector.shape_cast %14 : vector<128xf32> to vector<1x128xf32>
    %c1 = arith.constant 1 : index
    %16 = memref.load %arg2[%c1] : memref<2xf32, #tpu.memory_space<smem>>
    %17 = vector.broadcast %16 : f32 to vector<1x128xf32>
    %18 = arith.addf %15, %17 : vector<1x128xf32>
    %c1_7 = arith.constant 1 : index
    %c0_8 = arith.constant 0 : index
    %19 = vector.load %arg4[%c1_7, %c0_8] : memref<2x128xf32, #tpu.memory_space<vmem>>, vector<1x128xf32>
    tpu.vector_store %arg4[%c1_7, %c0_8], %18 {strides = array<i32>} : memref<2x128xf32, #tpu.memory_space<vmem>>, vector<1x128xf32>,
    return
  }
  func.func @transform_0(%arg0: i32) -> (i32, i32) {
    %c0_i32 = arith.constant 0 : i32
    %c0_i32_0 = arith.constant 0 : i32
    %c0_i32_1 = arith.constant 0 : i32
    return %c0_i32, %c0_i32_0 : i32, i32
  }
  func.func @transform_1(%arg0: i32) -> i32 {
    %c0_i32 = arith.constant 0 : i32
    %c0_i32_0 = arith.constant 0 : i32
    return %c0_i32 : i32
  }
  func.func @transform_2(%arg0: i32) -> (i32, i32) {
    %c0_i32 = arith.constant 0 : i32
    %c0_i32_0 = arith.constant 0 : i32
    return %c0_i32, %arg0 : i32, i32
  }
  func.func @transform_3(%arg0: i32) -> (i32, i32) {
    %c0_i32 = arith.constant 0 : i32
    %c0_i32_0 = arith.constant 0 : i32
    return %c0_i32, %arg0 : i32, i32
  }
}

</mosaic_0001>

<llo_original>
// kernel: tpu_custom_call.1
$region0: #{tpu_custom_call.1}
  #allocation0 [shape = 'u32[]', space=smem, size = 0x4, offset = 0x4, fixed_abs, tag = 'smem constant byte address 0x4 - core index']
  #allocation1 [shape = 'u32[144,128]{1,0:T(1,128)}', space=vmem, size = 0x12000, scoped, tag = 'internal scratch']
  %s0 = inlined_call_operand.vmem [shape: f32[4,2], index: 0, kind: input, shape index: {}]
  %s1 = inlined_call_operand.vmem [shape: f32[2], index: 1, kind: input, shape index: {}]
  %s2 = inlined_call_operand.vmem [shape: f32[4,2], index: 2, kind: input, shape index: {}]
  %s3 = inlined_call_operand.hbm [shape: f32[2,2], index: 3, kind: output, shape index: {}]
  %s4 = sld [smem:[#allocation0]]
  $region26: #{tpu_custom_call.1} parent=0
    _
  %s6 = ssub.s32 1, %s4
  %s7 = scalar_select 0, %s6, %s4
  $region1: #{tpu_custom_call.1} parent=0
    #allocation2 [shape = 'u8[512]{0}', space=smem, size = 0x200, scoped, tag = 'input window, operand 1, single buffered']
    #allocation3 [shape = 's32[1]{0}', space=sflag, size = 0x4, scoped, tag = 'scoped memory for tpu_custom_call.1']
    #allocation4 [shape = 's32[1]{0}', space=sflag, size = 0x4, scoped, tag = 'scoped memory for tpu_custom_call.1']
    #allocation5 [shape = 'u8[1024]{0}', space=vmem, size = 0x400, scoped, tag = 'output window, operand 0, single buffered']
    %8 = vsyncpa [#allocation4], 0
    %9 = vsyncpa [#allocation3], 0
    // Predicated region
    $region2: #{tpu_custom_call.1} parent=1 // pred_check
      _
    $region3: #{tpu_custom_call.1} parent=1 // pred_check_branch
      %11 = sbr.rel (0) target = $region5
    $region4: #{tpu_custom_call.1} parent=1 // pred_region
      _
    $region5: #{tpu_custom_call.1} parent=1 // pred_fallthru
      _
    // Predicated region
    $region6: #{tpu_custom_call.1} parent=1 // pred_check
      _
    $region7: #{tpu_custom_call.1} parent=1 // pred_check_branch
      %13 = sbr.rel (0) target = $region9
    $region8: #{tpu_custom_call.1} parent=1 // pred_region
      %s15 = ssub.s32 16, 16
      %16 = vsyncadd [#allocation4], %s15
      %s18 = sshll.u32 %s1, 4
      %s19 = int_to_ptr.vmem [resolvable:$true] %s18
      %21 = dma.vmem_to_smem %s19, 16, [#allocation2], [#allocation4]
    $region9: #{tpu_custom_call.1} parent=1 // pred_fallthru
      _
    // Predicated region
    $region10: #{tpu_custom_call.1} parent=1 // pred_check
      _
    $region11: #{tpu_custom_call.1} parent=1 // pred_check_branch
      %23 = sbr.rel (0) target = $region13
    $region12: #{tpu_custom_call.1} parent=1 // pred_region
      _
    $region13: #{tpu_custom_call.1} parent=1 // pred_fallthru
      _
    // Predicated region
    $region14: #{tpu_custom_call.1} parent=1 // pred_check
      _
    $region15: #{tpu_custom_call.1} parent=1 // pred_check_branch
      %25 = sbr.rel (0) target = $region17
    $region16: #{tpu_custom_call.1} parent=1 // pred_region
      %26 = dma.done [#allocation4], 16
    $region17: #{tpu_custom_call.1} parent=1 // pred_fallthru
      _
    %27 = sfence
    %v28 = vld [vmem:[%s2] sm:$0xf]
    %v29 = vld [vmem:[%s0] sm:$0xf]
    %31 = vset.pattern.permute.xlu0 0
    %32 = vperm.xlu0 %31, %v29
    %v33 = vpop.permute.xlu0 %32
    %v35 = vmul.f32 %v28, %v33
    %vm36 = vcmask 1043456
    %v37 = vsel %vm36, %v35, 0.0
    %v38 = vrot.slane %v37, 4
    %v39 = vadd.f32 %v37, %v38
    %v40 = vrot.slane %v39, 2
    %v41 = vadd.f32 %v39, %v40
    %v42 = vrot.slane %v41, 1
    %v43 = vadd.f32 %v41, %v42
    %s44 = sld [smem:[#allocation2]]
    %v45 = vstv %s44
    %v46 = vadd.f32 %v43, %v45
    %47 = vst [vmem:[#allocation5] sm:$0x1] %v46
    %48 = vset.pattern.permute.xlu0 1
    %49 = vperm.xlu0 %48, %v29
    %v50 = vpop.permute.xlu0 %49
    %v52 = vmul.f32 %v28, %v50
    %v53 = vsel %vm36, %v52, 0.0
    %v54 = vrot.slane %v53, 4
    %v55 = vadd.f32 %v53, %v54
    %v56 = vrot.slane %v55, 2
    %v57 = vadd.f32 %v55, %v56
    %v58 = vrot.slane %v57, 1
    %v59 = vadd.f32 %v57, %v58
    %s60 = sld [smem:[#allocation2 + $0x1]]
    %v61 = vstv %s60
    %v62 = vadd.f32 %v59, %v61
    %63 = vst [vmem:[#allocation5 + $0x1] sm:$0x1] %v62
    // Predicated region
    $region18: #{tpu_custom_call.1} parent=1 // pred_check
      _
    $region19: #{tpu_custom_call.1} parent=1 // pred_check_branch
      %65 = sbr.rel (0) target = $region21
    $region20: #{tpu_custom_call.1} parent=1 // pred_region
      %s67 = ssub.s32 32, 32
      %68 = vsyncadd [#allocation3], %s67
      %s70 = sshll.u32 [#allocation5], 4
      %s71 = int_to_ptr.vmem [resolvable:$true] %s70
      %73 = dma.vmem_to_hbm [thread:$0]  %s71, 32, %s3, [#allocation3]
    $region21: #{tpu_custom_call.1} parent=1 // pred_fallthru
      _
    // Predicated region
    $region22: #{tpu_custom_call.1} parent=1 // pred_check
      _
    $region23: #{tpu_custom_call.1} parent=1 // pred_check_branch
      %75 = sbr.rel (0) target = $region25
    $region24: #{tpu_custom_call.1} parent=1 // pred_region
      %76 = dma.done [#allocation3], 32
    $region25: #{tpu_custom_call.1} parent=1 // pred_fallthru
      _
    %77 = vsyncpa [#allocation3], 1
    %78 = vsyncpa [#allocation4], 1

</llo_original>
